<compile_context>
chip_gen: v7x
topology: tpu7x:2x2x1
jax: 0.10.0
libtpu: 0.0.40
codegen_flags: <defaults>
</compile_context>

<pallas_src>
import math
from functools import partial

import jax
import jax.numpy as jnp
import numpy as np
from jax.experimental import pallas as pl
from jax.experimental import pallas as _pl_unused  # noqa: F401
from jax.experimental.pallas import tpu as pltpu  # noqa: F401  (not needed at this size)

# ---------------- model hyper-parameters (small, consistent with the module) -------------
BATCH = 2
SEQ = 8
INPUT_SIZE = 16
EMBED_DIM = 32
NUM_HEADS = 4
HEAD_DIM = EMBED_DIM // NUM_HEADS
OUTPUT_SIZE = 4


def _model_kernel(xs_ref, w_ref, out_ref, *, batch, seq, d_in, embed_dim,
                  num_heads, out_dim):
    """Whole forward pass in one invocation.

    xs_ref : (B*S + B, D_in)  rows [0, B*S) = x flattened, rows [B*S, B*S+B) = x[:, -1, :]
    w_ref  : (3*D_in + 8 + 3*E, E) packed weight slab (see wrapper for layout)
    out_ref: (B, O)
    """
    f32 = jnp.float32
    D, E = d_in, embed_dim
    BS = batch * seq
    # slab row offsets (all static Python ints, 8-row aligned for D=16, E=32)
    r_b = 3 * D            # bias block (8 rows)
    r_seg = r_b + 8        # seg   (E, E)  -- only first `num_heads` columns non-zero
    r_segt = r_seg + E     # seg_t (E, E)  -- only first `num_heads` rows non-zero
    r_w2 = r_segt + E      # folded (out_proj o linear2) weight, padded to E lanes

    x = xs_ref[pl.ds(0, BS), :]                 # (B*S, D_in)
    x_last = xs_ref[pl.ds(BS, batch), :]        # (B, D_in)

    wq = w_ref[pl.ds(0, D), :]                  # (D, E), pre-scaled by 1/sqrt(Dh)
    wk = w_ref[pl.ds(D, D), :]                  # (D, E)
    wv = w_ref[pl.ds(2 * D, D), :]              # (D, E)
    b_blk = w_ref[pl.ds(r_b, 8), :]             # rows: bq, bk, bv, b2(out-pad), zeros
    seg = w_ref[pl.ds(r_seg, E), :]             # (E, E)
    seg_t = w_ref[pl.ds(r_segt, E), :]          # (E, E)
    w2 = w_ref[pl.ds(r_w2, E), :]               # (E, E), cols >= O are zero

    bq = b_blk[0:1, :]
    bk = b_blk[1:2, :]
    bv = b_blk[2:3, :]
    b2 = b_blk[3:4, :]

    # fused (linear1 o in_proj): K/V for all tokens, Q only for the last token.
    k = jnp.dot(x, wk, preferred_element_type=f32) + bk           # (B*S, E)
    v = jnp.dot(x, wv, preferred_element_type=f32) + bv           # (B*S, E)
    q = jnp.dot(x_last, wq, preferred_element_type=f32) + bq      # (B, E), already scaled

    k3 = k.reshape(batch, seq, E)
    v3 = v.reshape(batch, seq, E)

    # Per-head scores without a head loop:
    #   scores[b, s, h] = sum_{e in head h} q[b, e] * k[b, s, e]
    # realized as an elementwise product + one matmul against the 0/1 segment matrix.
    # Lanes h >= num_heads of `seg` are zero, so the padded score lanes carry zeros
    # (their softmax output is later annihilated by the zero rows of seg_t).
    prod = q[:, None, :] * k3                                      # (B, S, E)
    scores = jnp.dot(prod.reshape(BS, E), seg,
                     preferred_element_type=f32).reshape(batch, seq, E)

    # softmax over the sequence axis, independently per (batch, head-lane)
    m = jnp.max(scores, axis=1, keepdims=True)                     # (B, 1, E)
    p = jnp.exp(scores - m)
    denom = jnp.sum(p, axis=1, keepdims=True)                      # (B, 1, E)
    p = p * pl.reciprocal(denom, approx=False)                     # exact; keeps 1e-4 rtol

    # Expand per-head probabilities back to per-channel weights (seg_t rows >= H are 0).
    p_e = jnp.dot(p.reshape(BS, E), seg_t,
                  preferred_element_type=f32).reshape(batch, seq, E)
    ctx = jnp.sum(p_e * v3, axis=1)                                # (B, E) last-token context

    # folded (out_proj o linear2); padded output lanes are zero and sliced off.
    y = jnp.dot(ctx, w2, preferred_element_type=f32) + b2          # (B, E)
    out_ref[...] = y[:, 0:out_dim].astype(out_ref.dtype)           # (B, O)


@jax.jit
def model_forward(x, params):
    B, S, D_in = x.shape
    E = params["w_out"].shape[0]
    O = params["w2"].shape[0]
    H = NUM_HEADS
    Dh = E // H
    scale = 1.0 / math.sqrt(Dh)
    f32 = jnp.float32

    # --- algebraic folds (exact): linear1 into Q/K/V, out_proj into linear2 -------------
    w1t = params["w1"].T                                  # (D_in, E)
    w_in, b_in, b1 = params["w_in"], params["b_in"], params["b1"]
    wq_t = w_in[:E, :].T                                  # (E, E)
    wk_t = w_in[E:2 * E, :].T
    wv_t = w_in[2 * E:, :].T

    wq_f = (w1t @ wq_t) * scale                           # (D_in, E), scale folded in
    wk_f = w1t @ wk_t
    wv_f = w1t @ wv_t
    bq_f = (b1 @ wq_t + b_in[:, :E]) * scale              # (1, E)
    bk_f = b1 @ wk_t + b_in[:, E:2 * E]
    bv_f = b1 @ wv_t + b_in[:, 2 * E:]

    w2_f = params["w_out"].T @ params["w2"].T             # (E, O)
    b2_f = params["b_out"] @ params["w2"].T + params["b2"]  # (1, O)
    w2_pad = jnp.pad(w2_f, ((0, 0), (0, E - O)))          # (E, E)
    b2_pad = jnp.pad(b2_f, ((0, 0), (0, E - O)))          # (1, E)

    # --- head-segment matrices: compile-time constants, padded to E lanes/rows ----------
    e_idx = np.arange(E)
    seg_small = (e_idx[:, None] // Dh == np.arange(H)[None, :]).astype(np.float32)  # (E, H)
    seg_pad = np.zeros((E, E), np.float32)
    seg_pad[:, :H] = seg_small
    segt_pad = np.zeros((E, E), np.float32)
    segt_pad[:H, :] = seg_small.T

    # --- one packed weight slab (single DMA); 8-row-aligned sections ---------------------
    bias_blk = jnp.concatenate([bq_f, bk_f, bv_f, b2_pad, jnp.zeros((4, E), f32)], axis=0)
    wslab = jnp.concatenate(
        [wq_f, wk_f, wv_f, bias_blk, jnp.asarray(seg_pad), jnp.asarray(segt_pad), w2_pad],
        axis=0)                                            # (3*D_in + 8 + 3*E, E)

    # --- one packed activation slab: flattened x + last-token rows -----------------------
    xs = jnp.concatenate([x.reshape(B * S, D_in), x[:, -1, :]], axis=0)  # (B*S + B, D_in)

    kernel = partial(_model_kernel, batch=B, seq=S, d_in=D_in,
                     embed_dim=E, num_heads=H, out_dim=O)

    # Single invocation, no grid: whole problem (< 32 KiB of operands) fits in VMEM,
    # 2 input DMAs + 1 output store total.  Nothing to shard across cores at this size.
    return pl.pallas_call(
        kernel,
        out_shape=jax.ShapeDtypeStruct((B, O), f32),
        cost_estimate=pl.CostEstimate(flops=110_000,
                                      transcendentals=B * S * E,
                                      bytes_accessed=24_000),
    )(xs, wslab)


def reference_forward(x, params):
    """Pure-JAX reference mirroring PyTorch semantics (eval mode, unfolded)."""
    E, H, Dh = EMBED_DIM, NUM_HEADS, HEAD_DIM
    h = jnp.einsum("bsi,ei->bse", x, params["w1"]) + params["b1"][0]
    qkv = jnp.einsum("bse,fe->bsf", h, params["w_in"]) + params["b_in"][0]
    q, k, v = qkv[..., :E], qkv[..., E:2 * E], qkv[..., 2 * E:]
    B, S, _ = q.shape
    qh = q.reshape(B, S, H, Dh).transpose(0, 2, 1, 3)
    kh = k.reshape(B, S, H, Dh).transpose(0, 2, 1, 3)
    vh = v.reshape(B, S, H, Dh).transpose(0, 2, 1, 3)
    scores = jnp.einsum("bhqd,bhkd->bhqk", qh, kh) / math.sqrt(Dh)
    probs = jax.nn.softmax(scores, axis=-1)
    ctx = jnp.einsum("bhqk,bhkd->bhqd", probs, vh)
    ctx = ctx.transpose(0, 2, 1, 3).reshape(B, S, E)
    attn = jnp.einsum("bse,fe->bsf", ctx, params["w_out"]) + params["b_out"][0]
    last = attn[:, -1, :]
    return jnp.einsum("be,oe->bo", last, params["w2"]) + params["b2"][0]


def init_params(key):
    ks = jax.random.split(key, 6)
    s = 0.05
    return {
        "w1": (jax.random.normal(ks[0], (EMBED_DIM, INPUT_SIZE), jnp.float32) * s),
        "b1": (jax.random.normal(ks[1], (1, EMBED_DIM), jnp.float32) * s),
        "w_in": (jax.random.normal(ks[2], (3 * EMBED_DIM, EMBED_DIM), jnp.float32) * s),
        "b_in": (jax.random.normal(ks[3], (1, 3 * EMBED_DIM), jnp.float32) * s),
        "w_out": (jax.random.normal(ks[4], (EMBED_DIM, EMBED_DIM), jnp.float32) * s),
        "b_out": jnp.zeros((1, EMBED_DIM), jnp.float32),
        "w2": (jax.random.normal(ks[5], (OUTPUT_SIZE, EMBED_DIM), jnp.float32) * s),
        "b2": jnp.zeros((1, OUTPUT_SIZE), jnp.float32),
    }


if __name__ == "__main__":
    key = jax.random.PRNGKey(0)
    k_x, k_p = jax.random.split(key)
    x = jax.random.normal(k_x, (BATCH, SEQ, INPUT_SIZE), jnp.float32)
    params = init_params(k_p)

    out = model_forward(x, params)
    out = jax.block_until_ready(out)

    ref = jax.block_until_ready(reference_forward(x, params))
    np.testing.assert_allclose(np.asarray(out), np.asarray(ref), rtol=1e-4, atol=1e-5)

    print("KERNEL_OK")
</pallas_src>

<mosaic_0001>
module attributes {stable_mosaic.version = 11 : i64} {
  func.func @_model_kernel(%arg0: memref<18x16xf32, #tpu.memory_space<vmem>>, %arg1: memref<152x32xf32, #tpu.memory_space<vmem>>, %arg2: memref<2x4xf32, #tpu.memory_space<vmem>>) attributes {dimension_semantics = [], scalar_prefetch = 0 : i64, scratch_operands = 0 : i64, tpu.core_type = #tpu.core_type<tc>} {
    %c0 = arith.constant 0 : index
    %c0_0 = arith.constant 0 : index
    %0 = vector.load %arg0[%c0, %c0_0] : memref<18x16xf32, #tpu.memory_space<vmem>>, vector<16x16xf32>
    %c16 = arith.constant 16 : index
    %c0_1 = arith.constant 0 : index
    %1 = vector.load %arg0[%c16, %c0_1] : memref<18x16xf32, #tpu.memory_space<vmem>>, vector<2x16xf32>
    %c0_2 = arith.constant 0 : index
    %c0_3 = arith.constant 0 : index
    %2 = vector.load %arg1[%c0_2, %c0_3] : memref<152x32xf32, #tpu.memory_space<vmem>>, vector<16x32xf32>
    %c16_4 = arith.constant 16 : index
    %c0_5 = arith.constant 0 : index
    %3 = vector.load %arg1[%c16_4, %c0_5] : memref<152x32xf32, #tpu.memory_space<vmem>>, vector<16x32xf32>
    %c32 = arith.constant 32 : index
    %c0_6 = arith.constant 0 : index
    %4 = vector.load %arg1[%c32, %c0_6] : memref<152x32xf32, #tpu.memory_space<vmem>>, vector<16x32xf32>
    %c48 = arith.constant 48 : index
    %c0_7 = arith.constant 0 : index
    %5 = vector.load %arg1[%c48, %c0_7] : memref<152x32xf32, #tpu.memory_space<vmem>>, vector<8x32xf32>
    %c56 = arith.constant 56 : index
    %c0_8 = arith.constant 0 : index
    %6 = vector.load %arg1[%c56, %c0_8] : memref<152x32xf32, #tpu.memory_space<vmem>>, vector<32x32xf32>
    %c88 = arith.constant 88 : index
    %c0_9 = arith.constant 0 : index
    %7 = vector.load %arg1[%c88, %c0_9] : memref<152x32xf32, #tpu.memory_space<vmem>>, vector<32x32xf32>
    %c120 = arith.constant 120 : index
    %c0_10 = arith.constant 0 : index
    %8 = vector.load %arg1[%c120, %c0_10] : memref<152x32xf32, #tpu.memory_space<vmem>>, vector<32x32xf32>
    %9 = vector.extract_strided_slice %5 {offsets = [0, 0], sizes = [1, 32], strides = [1, 1]} : vector<8x32xf32> to vector<1x32xf32>
    %10 = vector.extract_strided_slice %5 {offsets = [1, 0], sizes = [1, 32], strides = [1, 1]} : vector<8x32xf32> to vector<1x32xf32>
    %11 = vector.extract_strided_slice %5 {offsets = [2, 0], sizes = [1, 32], strides = [1, 1]} : vector<8x32xf32> to vector<1x32xf32>
    %12 = vector.extract_strided_slice %5 {offsets = [3, 0], sizes = [1, 32], strides = [1, 1]} : vector<8x32xf32> to vector<1x32xf32>
    %cst = arith.constant dense<0.000000e+00> : vector<16x32xf32>
    %13 = tpu.matmul %0, %3, %cst {dimension_numbers = #tpu.dot_dimension_numbers<[1], [0], [0], [1], [0, 0, 1, 1], [], []>} : vector<16x16xf32>, vector<16x32xf32>, vector<16x32xf32> -> vector<16x32xf32>
    %14 = vector.broadcast %10 : vector<1x32xf32> to vector<16x32xf32>
    %15 = arith.addf %13, %14 : vector<16x32xf32>
    %cst_11 = arith.constant dense<0.000000e+00> : vector<16x32xf32>
    %16 = tpu.matmul %0, %4, %cst_11 {dimension_numbers = #tpu.dot_dimension_numbers<[1], [0], [0], [1], [0, 0, 1, 1], [], []>} : vector<16x16xf32>, vector<16x32xf32>, vector<16x32xf32> -> vector<16x32xf32>
    %17 = vector.broadcast %11 : vector<1x32xf32> to vector<16x32xf32>
    %18 = arith.addf %16, %17 : vector<16x32xf32>
    %cst_12 = arith.constant dense<0.000000e+00> : vector<2x32xf32>
    %19 = tpu.matmul %1, %2, %cst_12 {dimension_numbers = #tpu.dot_dimension_numbers<[1], [0], [0], [1], [0, 0, 1, 1], [], []>} : vector<2x16xf32>, vector<16x32xf32>, vector<2x32xf32> -> vector<2x32xf32>
    %20 = vector.broadcast %9 : vector<1x32xf32> to vector<2x32xf32>
    %21 = arith.addf %19, %20 : vector<2x32xf32>
    %22 = vector.shape_cast %15 : vector<16x32xf32> to vector<2x8x32xf32>
    %23 = vector.shape_cast %18 : vector<16x32xf32> to vector<2x8x32xf32>
    %24 = vector.shape_cast %21 : vector<2x32xf32> to vector<2x1x32xf32>
    %25 = vector.broadcast %24 : vector<2x1x32xf32> to vector<2x8x32xf32>
    %26 = arith.mulf %25, %22 : vector<2x8x32xf32>
    %27 = vector.shape_cast %26 : vector<2x8x32xf32> to vector<16x32xf32>
    %cst_13 = arith.constant dense<0.000000e+00> : vector<16x32xf32>
    %28 = tpu.matmul %27, %6, %cst_13 {dimension_numbers = #tpu.dot_dimension_numbers<[1], [0], [0], [1], [0, 0, 1, 1], [], []>} : vector<16x32xf32>, vector<32x32xf32>, vector<16x32xf32> -> vector<16x32xf32>
    %29 = vector.shape_cast %28 : vector<16x32xf32> to vector<2x8x32xf32>
    %cst_14 = arith.constant dense<0xFF800000> : vector<2x32xf32>
    %30 = vector.multi_reduction <maximumf>, %29, %cst_14 [1] : vector<2x8x32xf32> to vector<2x32xf32>
    %31 = vector.shape_cast %30 : vector<2x32xf32> to vector<2x1x32xf32>
    %32 = vector.broadcast %31 : vector<2x1x32xf32> to vector<2x8x32xf32>
    %33 = arith.subf %29, %32 : vector<2x8x32xf32>
    %34 = math.exp %33 : vector<2x8x32xf32>
    %cst_15 = arith.constant dense<0.000000e+00> : vector<2x32xf32>
    %35 = vector.multi_reduction <add>, %34, %cst_15 [1] : vector<2x8x32xf32> to vector<2x32xf32>
    %36 = vector.shape_cast %35 : vector<2x32xf32> to vector<2x1x32xf32>
    %37 = tpu.reciprocal %36 : vector<2x1x32xf32> -> vector<2x1x32xf32>
    %38 = vector.broadcast %37 : vector<2x1x32xf32> to vector<2x8x32xf32>
    %39 = arith.mulf %34, %38 : vector<2x8x32xf32>
    %40 = vector.shape_cast %39 : vector<2x8x32xf32> to vector<16x32xf32>
    %cst_16 = arith.constant dense<0.000000e+00> : vector<16x32xf32>
    %41 = tpu.matmul %40, %7, %cst_16 {dimension_numbers = #tpu.dot_dimension_numbers<[1], [0], [0], [1], [0, 0, 1, 1], [], []>} : vector<16x32xf32>, vector<32x32xf32>, vector<16x32xf32> -> vector<16x32xf32>
    %42 = vector.shape_cast %41 : vector<16x32xf32> to vector<2x8x32xf32>
    %43 = arith.mulf %42, %23 : vector<2x8x32xf32>
    %cst_17 = arith.constant dense<0.000000e+00> : vector<2x32xf32>
    %44 = vector.multi_reduction <add>, %43, %cst_17 [1] : vector<2x8x32xf32> to vector<2x32xf32>
    %cst_18 = arith.constant dense<0.000000e+00> : vector<2x32xf32>
    %45 = tpu.matmul %44, %8, %cst_18 {dimension_numbers = #tpu.dot_dimension_numbers<[1], [0], [0], [1], [0, 0, 1, 1], [], []>} : vector<2x32xf32>, vector<32x32xf32>, vector<2x32xf32> -> vector<2x32xf32>
    %46 = vector.broadcast %12 : vector<1x32xf32> to vector<2x32xf32>
    %47 = arith.addf %45, %46 : vector<2x32xf32>
    %48 = vector.extract_strided_slice %47 {offsets = [0, 0], sizes = [2, 4], strides = [1, 1]} : vector<2x32xf32> to vector<2x4xf32>
    %c0_19 = arith.constant 0 : index
    %c0_20 = arith.constant 0 : index
    %49 = vector.load %arg2[%c0_19, %c0_20] : memref<2x4xf32, #tpu.memory_space<vmem>>, vector<2x4xf32>
    tpu.vector_store %arg2[%c0_19, %c0_20], %48 {strides = array<i32>} : memref<2x4xf32, #tpu.memory_space<vmem>>, vector<2x4xf32>,
    return
  }
}

</mosaic_0001>

<llo_original>
// kernel: model_forward.1
$region0: #{model_forward.1}
  #allocation0 [shape = 'u32[]', space=smem, size = 0x4, offset = 0x4, fixed_abs, tag = 'smem constant byte address 0x4 - core index']
  #allocation1 [shape = 'u32[144,128]{1,0:T(1,128)}', space=vmem, size = 0x12000, scoped, tag = 'internal scratch']
  %s0 = inlined_call_operand.vmem [shape: f32[18,16], index: 0, kind: input, shape index: {}]
  %s1 = inlined_call_operand.vmem [shape: f32[152,32], index: 1, kind: input, shape index: {}]
  %s2 = inlined_call_operand.hbm [shape: f32[2,4], index: 2, kind: output, shape index: {}]
  %s3 = sld [smem:[#allocation0]]
  $region18: #{model_forward.1} parent=0
    _
  %s5 = ssub.s32 1, %s3
  %s6 = scalar_select 0, %s5, %s3
  $region1: #{model_forward.1} parent=0
    #allocation2 [shape = 'u8[1024]{0}', space=vmem, size = 0x400, scoped, tag = 'output window, operand 0, single buffered']
    #allocation3 [shape = 's32[1]{0}', space=sflag, size = 0x4, scoped, tag = 'scoped memory for model_forward.1']
    %7 = vsyncpa [#allocation3], 0
    // Predicated region
    $region2: #{model_forward.1} parent=1 // pred_check
      _
    $region3: #{model_forward.1} parent=1 // pred_check_branch
      %9 = sbr.rel (0) target = $region5
    $region4: #{model_forward.1} parent=1 // pred_region
      _
    $region5: #{model_forward.1} parent=1 // pred_fallthru
      _
    // Predicated region
    $region6: #{model_forward.1} parent=1 // pred_check
      _
    $region7: #{model_forward.1} parent=1 // pred_check_branch
      %11 = sbr.rel (0) target = $region9
    $region8: #{model_forward.1} parent=1 // pred_region
      _
    $region9: #{model_forward.1} parent=1 // pred_fallthru
      _
    %v12 = vld [vmem:[%s0] sm:$0xff]
    %v13 = vld [vmem:[%s0 + $0x8] sm:$0xff]
    %v14 = vld [vmem:[%s0 + $0x10] sm:$0x3]
    %v15 = vld [vmem:[%s1] sm:$0xff]
    %v16 = vld [vmem:[%s1 + $0x8] sm:$0xff]
    %v17 = vld [vmem:[%s1 + $0x10] sm:$0xff]
    %v18 = vld [vmem:[%s1 + $0x18] sm:$0xff]
    %v19 = vld [vmem:[%s1 + $0x20] sm:$0xff]
    %v20 = vld [vmem:[%s1 + $0x28] sm:$0xff]
    %v21 = vld [vmem:[%s1 + $0x30] sm:$0xff]
    %v22 = vld [vmem:[%s1 + $0x38] sm:$0xff]
    %v23 = vld [vmem:[%s1 + $0x40] sm:$0xff]
    %v24 = vld [vmem:[%s1 + $0x48] sm:$0xff]
    %v25 = vld [vmem:[%s1 + $0x50] sm:$0xff]
    %v26 = vld [vmem:[%s1 + $0x58] sm:$0xff]
    %v27 = vld [vmem:[%s1 + $0x60] sm:$0xff]
    %v28 = vld [vmem:[%s1 + $0x68] sm:$0xff]
    %v29 = vld [vmem:[%s1 + $0x70] sm:$0xff]
    %v30 = vld [vmem:[%s1 + $0x78] sm:$0xff]
    %v31 = vld [vmem:[%s1 + $0x80] sm:$0xff]
    %v32 = vld [vmem:[%s1 + $0x88] sm:$0xff]
    %v33 = vld [vmem:[%s1 + $0x90] sm:$0xff]
    %v34 = vlaneseq
    %v35 = vshrl.u32 %v34, 7
    %v36 = vsub.s32 1, %v35
    %v37 = vrot.slane %v21, %v36
    %vm38 = vcmask 130048
    %v40 = vsel %vm38, %v12, 0
    %v43 = vsel %vm38, %v13, 0
    %45 = vmatprep.subr.mxu0 0.0
    %46 = vmatpush1.msra.mxu0 %v17
    %47 = vmatprep.subr.mxu0 0.0
    %48 = vmatpush1.msra.mxu0 %v18
    %49 = vmatprep.subr.mxu0 0.0
    %50 = vmatpush1.msra.mxu0 0.0
    %51 = vmatprep.subr.mxu0 0.0
    %52 = vmatpush1.msra.mxu0 0.0
    %53 = vmatprep.subr.mxu0 0.0
    %54 = vmatpush1.msra.mxu0 0.0
    %55 = vmatprep.subr.mxu0 0.0
    %56 = vmatpush1.msra.mxu0 0.0
    %57 = vmatprep.subr.mxu0 0.0
    %58 = vmatpush1.msra.mxu0 0.0
    %59 = vmatprep.subr.mxu0 0.0
    %60 = vmatpush1.msra.mxu0 0.0
    %61 = vmatprep.subr.mxu0 0.0
    %62 = vmatpush1.msra.mxu0 0.0
    %63 = vmatprep.subr.mxu0 0.0
    %64 = vmatpush1.msra.mxu0 0.0
    %65 = vmatprep.subr.mxu0 0.0
    %66 = vmatpush1.msra.mxu0 0.0
    %67 = vmatprep.subr.mxu0 0.0
    %68 = vmatpush1.msra.mxu0 0.0
    %69 = vmatprep.subr.mxu0 0.0
    %70 = vmatpush1.msra.mxu0 0.0
    %71 = vmatprep.subr.mxu0 0.0
    %72 = vmatpush1.msra.mxu0 0.0
    %73 = vmatprep.subr.mxu0 0.0
    %74 = vmatpush1.msra.mxu0 0.0
    %75 = vmatprep.subr.mxu0 0.0
    %76 = vmatpush1.msra.mxu0 0.0
    %77 = vmatprep.subr.mxu0 0.0
    %78 = vmatpush1.msra.mxu0 0.0
    %79 = vmatprep.subr.mxu0 0.0
    %80 = vmatpush1.msra.mxu0 0.0
    %81 = vmatprep.subr.mxu0 0.0
    %82 = vmatpush1.msra.mxu0 0.0
    %83 = vmatprep.subr.mxu0 0.0
    %84 = vmatpush1.msra.mxu0 0.0
    %85 = vmatprep.subr.mxu0 0.0
    %86 = vmatpush1.msra.mxu0 0.0
    %87 = vmatprep.subr.mxu0 0.0
    %88 = vmatpush1.msra.mxu0 0.0
    %89 = vmatprep.subr.mxu0 0.0
    %90 = vmatpush1.msra.mxu0 0.0
    %91 = vmatprep.subr.mxu0 0.0
    %92 = vmatpush1.msra.mxu0 0.0
    %93 = vmatprep.subr.mxu0 0.0
    %94 = vmatpush1.msra.mxu0 0.0
    %95 = vmatprep.subr.mxu0 0.0
    %96 = vmatpush1.msra.mxu0 0.0
    %97 = vmatprep.subr.mxu0 0.0
    %98 = vmatpush1.msra.mxu0 0.0
    %99 = vmatprep.subr.mxu0 0.0
    %100 = vmatpush1.msra.mxu0 0.0
    %101 = vmatprep.subr.mxu0 0.0
    %102 = vmatpush1.msra.mxu0 0.0
    %103 = vmatprep.subr.mxu0 0.0
    %104 = vmatpush1.msra.mxu0 0.0
    %105 = vmatprep.subr.mxu0 0.0
    %106 = vmatpush1.msra.mxu0 0.0
    %107 = vmatprep.subr.mxu0 0.0
    %108 = vmatpush1.msra.mxu0 0.0
    %109 = vmatprep.mubr.f32.mxu0 0.0
    %110 = vmatmul.mubr.f32.gmra.mrb[0].mxu0 %v40
    %v111 = vpop.f32.mrb[0].mxu0
    %v112 = vadd.f32 %v37, %v111
    %v113 = vpop.f32.mrb[0].mxu0
    %114 = vmatprep.mubr.f32.mxu0 0.0
    %115 = vmatmul.mubr.f32.gmra.mrb[0].mxu0 %v43
    %v116 = vpop.f32.mrb[0].mxu0
    %v117 = vadd.f32 %v37, %v116
    %v118 = vpop.f32.mrb[0].mxu0
    %119 = vdwg.mxu0
    %v120 = vlaneseq
    %v121 = vshrl.u32 %v120, 7
    %v122 = vsub.s32 2, %v121
    %v123 = vrot.slane %v21, %v122
    %124 = vmatprep.subr.mxu0 0.0
    %125 = vmatpush1.msra.mxu0 %v19
    %126 = vmatprep.subr.mxu0 0.0
    %127 = vmatpush1.msra.mxu0 %v20
    %128 = vmatprep.subr.mxu0 0.0
    %129 = vmatpush1.msra.mxu0 0.0
    %130 = vmatprep.subr.mxu0 0.0
    %131 = vmatpush1.msra.mxu0 0.0
    %132 = vmatprep.subr.mxu0 0.0
    %133 = vmatpush1.msra.mxu0 0.0
    %134 = vmatprep.subr.mxu0 0.0
    %135 = vmatpush1.msra.mxu0 0.0
    %136 = vmatprep.subr.mxu0 0.0
    %137 = vmatpush1.msra.mxu0 0.0
    %138 = vmatprep.subr.mxu0 0.0
    %139 = vmatpush1.msra.mxu0 0.0
    %140 = vmatprep.subr.mxu0 0.0
    %141 = vmatpush1.msra.mxu0 0.0
    %142 = vmatprep.subr.mxu0 0.0
    %143 = vmatpush1.msra.mxu0 0.0
    %144 = vmatprep.subr.mxu0 0.0
    %145 = vmatpush1.msra.mxu0 0.0
    %146 = vmatprep.subr.mxu0 0.0
    %147 = vmatpush1.msra.mxu0 0.0
    %148 = vmatprep.subr.mxu0 0.0
    %149 = vmatpush1.msra.mxu0 0.0
    %150 = vmatprep.subr.mxu0 0.0
    %151 = vmatpush1.msra.mxu0 0.0
    %152 = vmatprep.subr.mxu0 0.0
    %153 = vmatpush1.msra.mxu0 0.0
    %154 = vmatprep.subr.mxu0 0.0
    %155 = vmatpush1.msra.mxu0 0.0
    %156 = vmatprep.subr.mxu0 0.0
    %157 = vmatpush1.msra.mxu0 0.0
    %158 = vmatprep.subr.mxu0 0.0
    %159 = vmatpush1.msra.mxu0 0.0
    %160 = vmatprep.subr.mxu0 0.0
    %161 = vmatpush1.msra.mxu0 0.0
    %162 = vmatprep.subr.mxu0 0.0
    %163 = vmatpush1.msra.mxu0 0.0
    %164 = vmatprep.subr.mxu0 0.0
    %165 = vmatpush1.msra.mxu0 0.0
    %166 = vmatprep.subr.mxu0 0.0
    %167 = vmatpush1.msra.mxu0 0.0
    %168 = vmatprep.subr.mxu0 0.0
    %169 = vmatpush1.msra.mxu0 0.0
    %170 = vmatprep.subr.mxu0 0.0
    %171 = vmatpush1.msra.mxu0 0.0
    %172 = vmatprep.subr.mxu0 0.0
    %173 = vmatpush1.msra.mxu0 0.0
    %174 = vmatprep.subr.mxu0 0.0
    %175 = vmatpush1.msra.mxu0 0.0
    %176 = vmatprep.subr.mxu0 0.0
    %177 = vmatpush1.msra.mxu0 0.0
    %178 = vmatprep.subr.mxu0 0.0
    %179 = vmatpush1.msra.mxu0 0.0
    %180 = vmatprep.subr.mxu0 0.0
    %181 = vmatpush1.msra.mxu0 0.0
    %182 = vmatprep.subr.mxu0 0.0
    %183 = vmatpush1.msra.mxu0 0.0
    %184 = vmatprep.subr.mxu0 0.0
    %185 = vmatpush1.msra.mxu0 0.0
    %186 = vmatprep.subr.mxu0 0.0
    %187 = vmatpush1.msra.mxu0 0.0
    %188 = vmatprep.mubr.f32.mxu0 0.0
    %189 = vmatmul.mubr.f32.gmra.mrb[0].mxu0 %v40
    %v190 = vpop.f32.mrb[0].mxu0
    %v191 = vadd.f32 %v123, %v190
    %v192 = vpop.f32.mrb[0].mxu0
    %193 = vmatprep.mubr.f32.mxu0 0.0
    %194 = vmatmul.mubr.f32.gmra.mrb[0].mxu0 %v43
    %v195 = vpop.f32.mrb[0].mxu0
    %v196 = vadd.f32 %v123, %v195
    %v197 = vpop.f32.mrb[0].mxu0
    %198 = vdwg.mxu0
    %v199 = vlaneseq
    %v200 = vshrl.u32 %v199, 7
    %v201 = vsub.s32 0, %v200
    %v202 = vrot.slane %v21, %v201
    %v204 = vsel %vm38, %v14, 0
    %206 = vmatprep.subr.mxu0 0.0
    %207 = vmatpush1.msra.mxu0 %v15
    %208 = vmatprep.subr.mxu0 0.0
    %209 = vmatpush1.msra.mxu0 %v16
    %210 = vmatprep.subr.mxu0 0.0
    %211 = vmatpush1.msra.mxu0 0.0
    %212 = vmatprep.subr.mxu0 0.0
    %213 = vmatpush1.msra.mxu0 0.0
    %214 = vmatprep.subr.mxu0 0.0
    %215 = vmatpush1.msra.mxu0 0.0
    %216 = vmatprep.subr.mxu0 0.0
    %217 = vmatpush1.msra.mxu0 0.0
    %218 = vmatprep.subr.mxu0 0.0
    %219 = vmatpush1.msra.mxu0 0.0
    %220 = vmatprep.subr.mxu0 0.0
    %221 = vmatpush1.msra.mxu0 0.0
    %222 = vmatprep.subr.mxu0 0.0
    %223 = vmatpush1.msra.mxu0 0.0
    %224 = vmatprep.subr.mxu0 0.0
    %225 = vmatpush1.msra.mxu0 0.0
    %226 = vmatprep.subr.mxu0 0.0
    %227 = vmatpush1.msra.mxu0 0.0
    %228 = vmatprep.subr.mxu0 0.0
    %229 = vmatpush1.msra.mxu0 0.0
    %230 = vmatprep.subr.mxu0 0.0
    %231 = vmatpush1.msra.mxu0 0.0
    %232 = vmatprep.subr.mxu0 0.0
    %233 = vmatpush1.msra.mxu0 0.0
    %234 = vmatprep.subr.mxu0 0.0
    %235 = vmatpush1.msra.mxu0 0.0
    %236 = vmatprep.subr.mxu0 0.0
    %237 = vmatpush1.msra.mxu0 0.0
    %238 = vmatprep.subr.mxu0 0.0
    %239 = vmatpush1.msra.mxu0 0.0
    %240 = vmatprep.subr.mxu0 0.0
    %241 = vmatpush1.msra.mxu0 0.0
    %242 = vmatprep.subr.mxu0 0.0
    %243 = vmatpush1.msra.mxu0 0.0
    %244 = vmatprep.subr.mxu0 0.0
    %245 = vmatpush1.msra.mxu0 0.0
    %246 = vmatprep.subr.mxu0 0.0
    %247 = vmatpush1.msra.mxu0 0.0
    %248 = vmatprep.subr.mxu0 0.0
    %249 = vmatpush1.msra.mxu0 0.0
    %250 = vmatprep.subr.mxu0 0.0
    %251 = vmatpush1.msra.mxu0 0.0
    %252 = vmatprep.subr.mxu0 0.0
    %253 = vmatpush1.msra.mxu0 0.0
    %254 = vmatprep.subr.mxu0 0.0
    %255 = vmatpush1.msra.mxu0 0.0
    %256 = vmatprep.subr.mxu0 0.0
    %257 = vmatpush1.msra.mxu0 0.0
    %258 = vmatprep.subr.mxu0 0.0
    %259 = vmatpush1.msra.mxu0 0.0
    %260 = vmatprep.subr.mxu0 0.0
    %261 = vmatpush1.msra.mxu0 0.0
    %262 = vmatprep.subr.mxu0 0.0
    %263 = vmatpush1.msra.mxu0 0.0
    %264 = vmatprep.subr.mxu0 0.0
    %265 = vmatpush1.msra.mxu0 0.0
    %266 = vmatprep.subr.mxu0 0.0
    %267 = vmatpush1.msra.mxu0 0.0
    %268 = vmatprep.subr.mxu0 0.0
    %269 = vmatpush1.msra.mxu0 0.0
    %270 = vmatprep.mubr.f32.mxu0 0.0
    %271 = vmatmul.mubr.f32.gmra.mrb[0].mxu0 %v204
    %v272 = vpop.f32.mrb[0].mxu0
    %v273 = vadd.f32 %v202, %v272
    %v274 = vpop.f32.mrb[0].mxu0
    %275 = vdwg.mxu0
    %v278 = vunpack.c.l.s4 1966171168
    %v279 = vunpack.c.0.s8 %v278
    %v280 = vlaneseq
    %v281 = vshrl.u32 %v280, 7
    %v282 = vsub.s32 %v279, %v281
    %v283 = vrot.slane %v273, %v282
    %v284 = vcombine.high %v283, %v283
    %v286 = vunpack.c.l.s4 1966171168
    %v287 = vunpack.c.0.s8 %v286
    %v288 = vlaneseq
    %v289 = vshrl.u32 %v288, 7
    %v290 = vsub.s32 %v287, %v289
    %v291 = vrot.slane %v283, %v290
    %v293 = vunpack.c.l.s4 1966171168
    %v294 = vunpack.c.0.s8 %v293
    %v295 = vlaneseq
    %v296 = vshrl.u32 %v295, 7
    %v297 = vsub.s32 %v294, %v296
    %v298 = vrot.slane %v284, %v297
    %v299 = vlaneseq
    %v300 = vshrl.u32 %v299, 7
    %v301 = vsub.s32 0, %v300
    %v302 = vrot.slane %v291, %v301
    %v303 = vlaneseq
    %v304 = vshrl.u32 %v303, 7
    %v305 = vsub.s32 0, %v304
    %v306 = vrot.slane %v298, %v305
    %v309 = vmul.f32 %v302, %v112
    %v310 = vmul.f32 %v306, %v117
    %vm311 = vcmask 261120
    %v313 = vsel %vm311, %v309, 0
    %v316 = vsel %vm311, %v310, 0
    %318 = vmatprep.subr.mxu0 0.0
    %319 = vmatpush1.msra.mxu0 %v22
    %320 = vmatprep.subr.mxu0 0.0
    %321 = vmatpush1.msra.mxu0 %v23
    %322 = vmatprep.subr.mxu0 0.0
    %323 = vmatpush1.msra.mxu0 %v24
    %324 = vmatprep.subr.mxu0 0.0
    %325 = vmatpush1.msra.mxu0 %v25
    %326 = vmatprep.subr.mxu0 0.0
    %327 = vmatpush1.msra.mxu0 0.0
    %328 = vmatprep.subr.mxu0 0.0
    %329 = vmatpush1.msra.mxu0 0.0
    %330 = vmatprep.subr.mxu0 0.0
    %331 = vmatpush1.msra.mxu0 0.0
    %332 = vmatprep.subr.mxu0 0.0
    %333 = vmatpush1.msra.mxu0 0.0
    %334 = vmatprep.subr.mxu0 0.0
    %335 = vmatpush1.msra.mxu0 0.0
    %336 = vmatprep.subr.mxu0 0.0
    %337 = vmatpush1.msra.mxu0 0.0
    %338 = vmatprep.subr.mxu0 0.0
    %339 = vmatpush1.msra.mxu0 0.0
    %340 = vmatprep.subr.mxu0 0.0
    %341 = vmatpush1.msra.mxu0 0.0
    %342 = vmatprep.subr.mxu0 0.0
    %343 = vmatpush1.msra.mxu0 0.0
    %344 = vmatprep.subr.mxu0 0.0
    %345 = vmatpush1.msra.mxu0 0.0
    %346 = vmatprep.subr.mxu0 0.0
    %347 = vmatpush1.msra.mxu0 0.0
    %348 = vmatprep.subr.mxu0 0.0
    %349 = vmatpush1.msra.mxu0 0.0
    %350 = vmatprep.subr.mxu0 0.0
    %351 = vmatpush1.msra.mxu0 0.0
    %352 = vmatprep.subr.mxu0 0.0
    %353 = vmatpush1.msra.mxu0 0.0
    %354 = vmatprep.subr.mxu0 0.0
    %355 = vmatpush1.msra.mxu0 0.0
    %356 = vmatprep.subr.mxu0 0.0
    %357 = vmatpush1.msra.mxu0 0.0
    %358 = vmatprep.subr.mxu0 0.0
    %359 = vmatpush1.msra.mxu0 0.0
    %360 = vmatprep.subr.mxu0 0.0
    %361 = vmatpush1.msra.mxu0 0.0
    %362 = vmatprep.subr.mxu0 0.0
    %363 = vmatpush1.msra.mxu0 0.0
    %364 = vmatprep.subr.mxu0 0.0
    %365 = vmatpush1.msra.mxu0 0.0
    %366 = vmatprep.subr.mxu0 0.0
    %367 = vmatpush1.msra.mxu0 0.0
    %368 = vmatprep.subr.mxu0 0.0
    %369 = vmatpush1.msra.mxu0 0.0
    %370 = vmatprep.subr.mxu0 0.0
    %371 = vmatpush1.msra.mxu0 0.0
    %372 = vmatprep.subr.mxu0 0.0
    %373 = vmatpush1.msra.mxu0 0.0
    %374 = vmatprep.subr.mxu0 0.0
    %375 = vmatpush1.msra.mxu0 0.0
    %376 = vmatprep.subr.mxu0 0.0
    %377 = vmatpush1.msra.mxu0 0.0
    %378 = vmatprep.subr.mxu0 0.0
    %379 = vmatpush1.msra.mxu0 0.0
    %380 = vmatprep.subr.mxu0 0.0
    %381 = vmatpush1.msra.mxu0 0.0
    %382 = vmatprep.mubr.f32.mxu0 0.0
    %383 = vmatmul.mubr.f32.gmra.mrb[0].mxu0 %v313
    %v384 = vpop.f32.mrb[0].mxu0
    %v385 = vadd.f32 0.0, %v384
    %v386 = vpop.f32.mrb[0].mxu0
    %387 = vmatprep.mubr.f32.mxu0 0.0
    %388 = vmatmul.mubr.f32.gmra.mrb[0].mxu0 %v316
    %v389 = vpop.f32.mrb[0].mxu0
    %v390 = vadd.f32 0.0, %v389
    %v391 = vpop.f32.mrb[0].mxu0
    %392 = vdwg.mxu0
    %v393 = vsel %vm311, %v385, -inf
    %v394 = vrot.slane %v393, 4
    %v395 = vmax.f32 %v393, %v394
    %v396 = vrot.slane %v395, 2
    %v397 = vmax.f32 %v395, %v396
    %v398 = vrot.slane %v397, 1
    %v399 = vmax.f32 %v397, %v398
    %v400 = vsel %vm311, %v390, -inf
    %v401 = vrot.slane %v400, 4
    %v402 = vmax.f32 %v400, %v401
    %v403 = vrot.slane %v402, 2
    %v404 = vmax.f32 %v402, %v403
    %v405 = vrot.slane %v404, 1
    %v406 = vmax.f32 %v404, %v405
    %v407 = vsub.f32 %v385, %v399
    %v408 = vsub.f32 %v390, %v406
    %v409 = vmul.f32 %v407, 1.442695
    %v410 = vpow.pop %v409
    %v411 = vmul.f32 %v408, 1.442695
    %v412 = vpow.pop %v411
    %v413 = vsel %vm311, %v410, 0.0
    %v414 = vrot.slane %v413, 4
    %v415 = vadd.f32 %v413, %v414
    %v416 = vrot.slane %v415, 2
    %v417 = vadd.f32 %v415, %v416
    %v418 = vrot.slane %v417, 1
    %v419 = vadd.f32 %v417, %v418
    %v420 = vsel %vm311, %v412, 0.0
    %v421 = vrot.slane %v420, 4
    %v422 = vadd.f32 %v420, %v421
    %v423 = vrot.slane %v422, 2
    %v424 = vadd.f32 %v422, %v423
    %v425 = vrot.slane %v424, 1
    %v426 = vadd.f32 %v424, %v425
    %v427 = vrcp.pop %v419
    %v428 = vrcp.pop %v426
    %v429 = vmul.f32 %v410, %v427
    %v430 = vmul.f32 %v412, %v428
    %v432 = vsel %vm311, %v429, 0
    %v435 = vsel %vm311, %v430, 0
    %437 = vmatprep.subr.mxu0 0.0
    %438 = vmatpush1.msra.mxu0 %v26
    %439 = vmatprep.subr.mxu0 0.0
    %440 = vmatpush1.msra.mxu0 %v27
    %441 = vmatprep.subr.mxu0 0.0
    %442 = vmatpush1.msra.mxu0 %v28
    %443 = vmatprep.subr.mxu0 0.0
    %444 = vmatpush1.msra.mxu0 %v29
    %445 = vmatprep.subr.mxu0 0.0
    %446 = vmatpush1.msra.mxu0 0.0
    %447 = vmatprep.subr.mxu0 0.0
    %448 = vmatpush1.msra.mxu0 0.0
    %449 = vmatprep.subr.mxu0 0.0
    %450 = vmatpush1.msra.mxu0 0.0
    %451 = vmatprep.subr.mxu0 0.0
    %452 = vmatpush1.msra.mxu0 0.0
    %453 = vmatprep.subr.mxu0 0.0
    %454 = vmatpush1.msra.mxu0 0.0
    %455 = vmatprep.subr.mxu0 0.0
    %456 = vmatpush1.msra.mxu0 0.0
    %457 = vmatprep.subr.mxu0 0.0
    %458 = vmatpush1.msra.mxu0 0.0
    %459 = vmatprep.subr.mxu0 0.0
    %460 = vmatpush1.msra.mxu0 0.0
    %461 = vmatprep.subr.mxu0 0.0
    %462 = vmatpush1.msra.mxu0 0.0
    %463 = vmatprep.subr.mxu0 0.0
    %464 = vmatpush1.msra.mxu0 0.0
    %465 = vmatprep.subr.mxu0 0.0
    %466 = vmatpush1.msra.mxu0 0.0
    %467 = vmatprep.subr.mxu0 0.0
    %468 = vmatpush1.msra.mxu0 0.0
    %469 = vmatprep.subr.mxu0 0.0
    %470 = vmatpush1.msra.mxu0 0.0
    %471 = vmatprep.subr.mxu0 0.0
    %472 = vmatpush1.msra.mxu0 0.0
    %473 = vmatprep.subr.mxu0 0.0
    %474 = vmatpush1.msra.mxu0 0.0
    %475 = vmatprep.subr.mxu0 0.0
    %476 = vmatpush1.msra.mxu0 0.0
    %477 = vmatprep.subr.mxu0 0.0
    %478 = vmatpush1.msra.mxu0 0.0
    %479 = vmatprep.subr.mxu0 0.0
    %480 = vmatpush1.msra.mxu0 0.0
    %481 = vmatprep.subr.mxu0 0.0
    %482 = vmatpush1.msra.mxu0 0.0
    %483 = vmatprep.subr.mxu0 0.0
    %484 = vmatpush1.msra.mxu0 0.0
    %485 = vmatprep.subr.mxu0 0.0
    %486 = vmatpush1.msra.mxu0 0.0
    %487 = vmatprep.subr.mxu0 0.0
    %488 = vmatpush1.msra.mxu0 0.0
    %489 = vmatprep.subr.mxu0 0.0
    %490 = vmatpush1.msra.mxu0 0.0
    %491 = vmatprep.subr.mxu0 0.0
    %492 = vmatpush1.msra.mxu0 0.0
    %493 = vmatprep.subr.mxu0 0.0
    %494 = vmatpush1.msra.mxu0 0.0
    %495 = vmatprep.subr.mxu0 0.0
    %496 = vmatpush1.msra.mxu0 0.0
    %497 = vmatprep.subr.mxu0 0.0
    %498 = vmatpush1.msra.mxu0 0.0
    %499 = vmatprep.subr.mxu0 0.0
    %500 = vmatpush1.msra.mxu0 0.0
    %501 = vmatprep.mubr.f32.mxu0 0.0
    %502 = vmatmul.mubr.f32.gmra.mrb[0].mxu0 %v432
    %v503 = vpop.f32.mrb[0].mxu0
    %v504 = vadd.f32 0.0, %v503
    %v505 = vpop.f32.mrb[0].mxu0
    %506 = vmatprep.mubr.f32.mxu0 0.0
    %507 = vmatmul.mubr.f32.gmra.mrb[0].mxu0 %v435
    %v508 = vpop.f32.mrb[0].mxu0
    %v509 = vadd.f32 0.0, %v508
    %v510 = vpop.f32.mrb[0].mxu0
    %511 = vdwg.mxu0
    %v512 = vmul.f32 %v504, %v191
    %v513 = vmul.f32 %v509, %v196
    %v514 = vsel %vm311, %v512, 0.0
    %v515 = vrot.slane %v514, 4
    %v516 = vadd.f32 %v514, %v515
    %v517 = vrot.slane %v516, 2
    %v518 = vadd.f32 %v516, %v517
    %v519 = vrot.slane %v518, 1
    %v520 = vadd.f32 %v518, %v519
    %v521 = vsel %vm311, %v513, 0.0
    %v522 = vrot.slane %v521, 4
    %v523 = vadd.f32 %v521, %v522
    %v524 = vrot.slane %v523, 2
    %v525 = vadd.f32 %v523, %v524
    %v526 = vrot.slane %v525, 1
    %v527 = vadd.f32 %v525, %v526
    %v528 = vlaneseq
    %v529 = vshrl.u32 %v528, 7
    %v530 = vsub.s32 3, %v529
    %v531 = vrot.slane %v21, %v530
    %vm534 = vcmask 1041409
    %v535 = vsel %vm534, %v527, %v520
    %v536 = vsel %vm311, %v535, 0
    %538 = vmatprep.subr.mxu0 0.0
    %539 = vmatpush1.msra.mxu0 %v30
    %540 = vmatprep.subr.mxu0 0.0
    %541 = vmatpush1.msra.mxu0 %v31
    %542 = vmatprep.subr.mxu0 0.0
    %543 = vmatpush1.msra.mxu0 %v32
    %544 = vmatprep.subr.mxu0 0.0
    %545 = vmatpush1.msra.mxu0 %v33
    %546 = vmatprep.subr.mxu0 0.0
    %547 = vmatpush1.msra.mxu0 0.0
    %548 = vmatprep.subr.mxu0 0.0
    %549 = vmatpush1.msra.mxu0 0.0
    %550 = vmatprep.subr.mxu0 0.0
    %551 = vmatpush1.msra.mxu0 0.0
    %552 = vmatprep.subr.mxu0 0.0
    %553 = vmatpush1.msra.mxu0 0.0
    %554 = vmatprep.subr.mxu0 0.0
    %555 = vmatpush1.msra.mxu0 0.0
    %556 = vmatprep.subr.mxu0 0.0
    %557 = vmatpush1.msra.mxu0 0.0
    %558 = vmatprep.subr.mxu0 0.0
    %559 = vmatpush1.msra.mxu0 0.0
    %560 = vmatprep.subr.mxu0 0.0
    %561 = vmatpush1.msra.mxu0 0.0
    %562 = vmatprep.subr.mxu0 0.0
    %563 = vmatpush1.msra.mxu0 0.0
    %564 = vmatprep.subr.mxu0 0.0
    %565 = vmatpush1.msra.mxu0 0.0
    %566 = vmatprep.subr.mxu0 0.0
    %567 = vmatpush1.msra.mxu0 0.0
    %568 = vmatprep.subr.mxu0 0.0
    %569 = vmatpush1.msra.mxu0 0.0
    %570 = vmatprep.subr.mxu0 0.0
    %571 = vmatpush1.msra.mxu0 0.0
    %572 = vmatprep.subr.mxu0 0.0
    %573 = vmatpush1.msra.mxu0 0.0
    %574 = vmatprep.subr.mxu0 0.0
    %575 = vmatpush1.msra.mxu0 0.0
    %576 = vmatprep.subr.mxu0 0.0
    %577 = vmatpush1.msra.mxu0 0.0
    %578 = vmatprep.subr.mxu0 0.0
    %579 = vmatpush1.msra.mxu0 0.0
    %580 = vmatprep.subr.mxu0 0.0
    %581 = vmatpush1.msra.mxu0 0.0
    %582 = vmatprep.subr.mxu0 0.0
    %583 = vmatpush1.msra.mxu0 0.0
    %584 = vmatprep.subr.mxu0 0.0
    %585 = vmatpush1.msra.mxu0 0.0
    %586 = vmatprep.subr.mxu0 0.0
    %587 = vmatpush1.msra.mxu0 0.0
    %588 = vmatprep.subr.mxu0 0.0
    %589 = vmatpush1.msra.mxu0 0.0
    %590 = vmatprep.subr.mxu0 0.0
    %591 = vmatpush1.msra.mxu0 0.0
    %592 = vmatprep.subr.mxu0 0.0
    %593 = vmatpush1.msra.mxu0 0.0
    %594 = vmatprep.subr.mxu0 0.0
    %595 = vmatpush1.msra.mxu0 0.0
    %596 = vmatprep.subr.mxu0 0.0
    %597 = vmatpush1.msra.mxu0 0.0
    %598 = vmatprep.subr.mxu0 0.0
    %599 = vmatpush1.msra.mxu0 0.0
    %600 = vmatprep.subr.mxu0 0.0
    %601 = vmatpush1.msra.mxu0 0.0
    %602 = vmatprep.mubr.f32.mxu0 0.0
    %603 = vmatmul.mubr.f32.gmra.mrb[0].mxu0 %v536
    %v604 = vpop.f32.mrb[0].mxu0
    %v605 = vadd.f32 %v531, %v604
    %v606 = vpop.f32.mrb[0].mxu0
    %607 = vdwg.mxu0
    %vm608 = vcmask 25600
    %609 = vst.msk [vmem:[#allocation2] sm:$0x3] %vm608, %v605
    // Predicated region
    $region10: #{model_forward.1} parent=1 // pred_check
      _
    $region11: #{model_forward.1} parent=1 // pred_check_branch
      %611 = sbr.rel (0) target = $region13
    $region12: #{model_forward.1} parent=1 // pred_region
      %s613 = ssub.s32 32, 32
      %614 = vsyncadd [#allocation3], %s613
      %s616 = sshll.u32 [#allocation2], 4
      %s617 = int_to_ptr.vmem [resolvable:$true] %s616
      %619 = dma.vmem_to_hbm [thread:$0]  %s617, 32, %s2, [#allocation3]
    $region13: #{model_forward.1} parent=1 // pred_fallthru
      _
    // Predicated region
    $region14: #{model_forward.1} parent=1 // pred_check
      _
    $region15: #{model_forward.1} parent=1 // pred_check_branch
      %621 = sbr.rel (0) target = $region17
    $region16: #{model_forward.1} parent=1 // pred_region
      %622 = dma.done [#allocation3], 32
    $region17: #{model_forward.1} parent=1 // pred_fallthru
      _
    %623 = vsyncpa [#allocation3], 1

</llo_original>
